<compile_context>
chip_gen: v5e
topology: v5e:2x2
jax: 0.10.0
libtpu: 0.0.40
codegen_flags: <defaults>
</compile_context>

<pallas_src>
import contextlib
import functools
from typing import List, Sequence, Tuple, Union

import jax
import jax.numpy as jnp
from jax import lax
from jax.experimental import pallas as pl
from jax.experimental.pallas import tpu as pltpu


# --------------------------------------------------------------------------
# small helpers used inside kernels
# --------------------------------------------------------------------------
def _ln(x, g, b, eps=1e-6):
    mu = jnp.mean(x, axis=-1, keepdims=True)
    var = jnp.mean((x - mu) ** 2, axis=-1, keepdims=True)
    return (x - mu) * lax.rsqrt(var + eps) * g + b


def _gelu(x):
    # TODO(synk): PyTorch nn.GELU defaults to exact erf; tanh approx differs ~1e-3.
    c = 0.7978845608028654  # sqrt(2/pi)
    return 0.5 * x * (1.0 + jnp.tanh(c * (x + 0.044715 * x * x * x)))


# --------------------------------------------------------------------------
# patch-embed matmul (M-tiled)
# --------------------------------------------------------------------------
def _matmul_bias_kernel(x_ref, w_ref, b_ref, o_ref):
    o_ref[...] = (
        jnp.dot(x_ref[...].astype(jnp.bfloat16), w_ref[...],
                preferred_element_type=jnp.float32)
        + b_ref[...]
    )


def matmul_bias(x, w, b, *, tile_m=512):
    """x: (M, K) f32 @ w: (K, N) bf16 + b: (1, N) f32 -> (M, N) f32, tiled over M."""
    M, K = x.shape
    _, N = w.shape
    tm = min(tile_m, M)
    if M % tm != 0:       # tiny/demo shapes: fall back to a single block
        tm = M
    return pl.pallas_call(
        _matmul_bias_kernel,
        grid=(M // tm,),
        out_shape=jax.ShapeDtypeStruct((M, N), jnp.float32),
        in_specs=[pl.BlockSpec((tm, K), lambda i: (i, 0)),
                  pl.BlockSpec((K, N), lambda i: (0, 0)),
                  pl.BlockSpec((1, N), lambda i: (0, 0))],
        out_specs=pl.BlockSpec((tm, N), lambda i: (i, 0)),
        compiler_params=pltpu.CompilerParams(dimension_semantics=("parallel",)),
    )(x, w, b)


# --------------------------------------------------------------------------
# fused transformer stack: grid = (B, depth), activation resident in VMEM
# --------------------------------------------------------------------------
def _fused_blocks_kernel(x_ref, ln1_g_ref, ln1_b_ref, wqkv_ref, bqkv_ref,
                         wo_ref, bo_ref, ln2_g_ref, ln2_b_ref,
                         w1_ref, b1_ref, w2_ref, b2_ref,
                         norm_g_ref, norm_b_ref,
                         o_ref, act_ref,
                         *, num_heads, head_dim, t_valid, t_pad,
                         select, apply_norm):
    l = pl.program_id(1)
    D = num_heads * head_dim

    # Load the prepared tokens for this batch element once, at layer 0.
    @pl.when(l == 0)
    def _init():
        act_ref[...] = x_ref[0]

    x = act_ref[...]                                         # (T_pad, D) f32

    # ---------------- attention ----------------
    h = _ln(x, ln1_g_ref[0], ln1_b_ref[0])
    h_bf = h.astype(jnp.bfloat16)
    qkv = (jnp.dot(h_bf, wqkv_ref[0], preferred_element_type=jnp.float32)
           + bqkv_ref[0])                                    # (T_pad, 3D) f32
    q = qkv[:, 0:D]
    k = qkv[:, D:2 * D]
    v = qkv[:, 2 * D:3 * D]

    # mask padded key columns (pad rows themselves are never read)
    if t_pad != t_valid:
        col = lax.broadcasted_iota(jnp.int32, (t_pad, t_pad), 1)
        key_bias = jnp.where(col < t_valid, 0.0, -1e30).astype(jnp.float32)
    else:
        key_bias = None

    scale = 1.0 / (head_dim ** 0.5)
    wo = wo_ref[0]                                           # (D, D) bf16
    attn_out = jnp.zeros((t_pad, D), jnp.float32)
    for hh in range(num_heads):                              # tiny unrolled loop
        sl = slice(hh * head_dim, (hh + 1) * head_dim)       # 128-lane aligned
        qh = (q[:, sl] * scale).astype(jnp.bfloat16)
        kh = k[:, sl].astype(jnp.bfloat16)
        vh = v[:, sl].astype(jnp.bfloat16)
        # scores: contract last dims of both operands -> no explicit transpose
        s = lax.dot_general(qh, kh, (((1,), (1,)), ((), ())),
                            preferred_element_type=jnp.float32)   # (T_pad, T_pad)
        if key_bias is not None:
            s = s + key_bias
        s = s - jnp.max(s, axis=-1, keepdims=True)
        p = jnp.exp(s)
        p = p * pl.reciprocal(jnp.sum(p, axis=-1, keepdims=True), approx=True)
        ctx = jnp.dot(p.astype(jnp.bfloat16), vh,
                      preferred_element_type=jnp.float32)         # (T_pad, hd)
        # per-head output projection accumulated directly (no concatenate)
        attn_out = attn_out + jnp.dot(ctx.astype(jnp.bfloat16), wo[sl, :],
                                      preferred_element_type=jnp.float32)
    x = x + attn_out + bo_ref[0]

    # ---------------- MLP ----------------
    h2 = _ln(x, ln2_g_ref[0], ln2_b_ref[0])
    m = (jnp.dot(h2.astype(jnp.bfloat16), w1_ref[0],
                 preferred_element_type=jnp.float32) + b1_ref[0])
    m = _gelu(m)
    m = (jnp.dot(m.astype(jnp.bfloat16), w2_ref[0],
                 preferred_element_type=jnp.float32) + b2_ref[0])
    x = x + m
    act_ref[...] = x

    # ---------------- selected-layer epilogue (fused final LayerNorm) ----------
    is_sel = functools.reduce(jnp.logical_or, [l == s for s in select])

    @pl.when(is_sel)
    def _store():
        if apply_norm:
            o_ref[0, 0] = _ln(x, norm_g_ref[...], norm_b_ref[...])
        else:
            o_ref[0, 0] = x


def fused_vit_blocks(x, p, select, *, num_heads, depth, t_valid, apply_norm=True):
    """x: (B, T_pad, D) f32 prepared tokens.  Returns (num_sel, B, T_pad, D) f32."""
    B, T_pad, D = x.shape
    head_dim = D // num_heads
    mlp_dim = p["w1"].shape[2]
    sel = tuple(int(s) for s in sorted(select))
    num_sel = len(sel)

    kernel = functools.partial(
        _fused_blocks_kernel, num_heads=num_heads, head_dim=head_dim,
        t_valid=t_valid, t_pad=T_pad, select=sel, apply_norm=apply_norm)

    def per_layer(*trailing):
        zeros = (0,) * len(trailing)
        return pl.BlockSpec((1,) + tuple(trailing),
                            lambda b, l, _z=zeros: (l,) + _z)

    def out_index(b, l):
        # slot(l) = number of selected layers strictly below l (clipped);
        # the block stays resident until the slot changes, and the kernel
        # writes it exactly once, at l == sel[slot].
        cnt = 0
        for s in sel:
            cnt = cnt + jnp.where(l > s, 1, 0)
        return (jnp.minimum(cnt, num_sel - 1), b, 0, 0)

    vmem = pl.BlockSpec(memory_space=pltpu.MemorySpace.VMEM)

    return pl.pallas_call(
        kernel,
        grid=(B, depth),
        out_shape=jax.ShapeDtypeStruct((num_sel, B, T_pad, D), jnp.float32),
        in_specs=[
            pl.BlockSpec((1, T_pad, D), lambda b, l: (b, 0, 0)),  # tokens
            per_layer(1, D), per_layer(1, D),                     # ln1 g,b
            per_layer(D, 3 * D), per_layer(1, 3 * D),             # wqkv, bqkv
            per_layer(D, D), per_layer(1, D),                     # wo, bo
            per_layer(1, D), per_layer(1, D),                     # ln2 g,b
            per_layer(D, mlp_dim), per_layer(1, mlp_dim),         # w1, b1
            per_layer(mlp_dim, D), per_layer(1, D),               # w2, b2
            vmem, vmem,                                           # final norm g,b
        ],
        out_specs=pl.BlockSpec((1, 1, T_pad, D), out_index),
        scratch_shapes=[pltpu.VMEM((T_pad, D), jnp.float32)],
        compiler_params=pltpu.CompilerParams(
            dimension_semantics=("parallel", "arbitrary")),
    )(x, p["ln1_g"], p["ln1_b"], p["wqkv"], p["bqkv"], p["wo"], p["bo"],
      p["ln2_g"], p["ln2_b"], p["w1"], p["b1"], p["w2"], p["b2"],
      p["norm_g"], p["norm_b"])


# --------------------------------------------------------------------------
# Synthetic DINOv2-style ViT feature model (glue in plain JAX, hot paths Pallas)
# --------------------------------------------------------------------------
class ViTFeatureModel:
    def __init__(self, params, *, patch_size, num_heads, depth):
        self.p = params
        self.patch_size = patch_size
        self.num_heads = num_heads
        self.depth = depth

    def _prepare_tokens(self, images):
        # images: (B, C, H, W) -- NCHW, matching the PyTorch conv convention.
        B, C, H, W = images.shape
        ps = self.patch_size
        Hp, Wp = H // ps, W // ps
        # Patch extraction == Conv2d(kernel=stride=patch) flattened as (c,ph,pw).
        patches = images.reshape(B, C, Hp, ps, Wp, ps)
        patches = jnp.transpose(patches, (0, 2, 4, 1, 3, 5))
        patches = patches.reshape(B * Hp * Wp, C * ps * ps)
        D = self.p["w_pe"].shape[1]
        x = matmul_bias(patches, self.p["w_pe"], self.p["b_pe"])
        x = x.reshape(B, Hp * Wp, D)
        cls = jnp.broadcast_to(self.p["cls_token"], (B, 1, D))
        x = jnp.concatenate([cls, x], axis=1) + self.p["pos_embed"]
        t_valid = x.shape[1]
        t_pad = ((t_valid + 7) // 8) * 8          # sublane-align the token axis
        if t_pad != t_valid:
            x = jnp.pad(x, ((0, 0), (0, t_pad - t_valid), (0, 0)))
        return x, t_valid

    def get_intermediate_layers(
        self,
        images,
        n: Union[int, Sequence[int]] = 1,
        return_class_token: bool = True,
        norm: bool = True,
    ) -> Tuple:
        x, t_valid = self._prepare_tokens(images)
        blocks_to_take = (
            list(range(self.depth - n, self.depth)) if isinstance(n, int)
            else sorted(int(i) for i in n)
        )
        outs = fused_vit_blocks(
            x, self.p, blocks_to_take, num_heads=self.num_heads,
            depth=self.depth, t_valid=t_valid, apply_norm=norm)
        outputs = [outs[j] for j in range(len(blocks_to_take))]
        class_tokens = [o[:, 0] for o in outputs]
        patch_tokens = [o[:, 1:t_valid] for o in outputs]
        if return_class_token:
            return tuple(zip(patch_tokens, class_tokens))
        return tuple(patch_tokens)


class ModelWithIntermediateLayers:
    """JAX/Pallas equivalent of the PyTorch wrapper."""

    def __init__(self, feature_model, select_layers: Union[int, List[int]],
                 autocast_ctx):
        self.feature_model = feature_model
        self.select_layers = select_layers
        self.autocast_ctx = autocast_ctx
        # TODO(synk): torch.inference_mode() has no JAX equivalent (inference is
        # the default); autocast is approximated by bf16 MXU inputs inside kernels.

    def __call__(self, images):
        with self.autocast_ctx():
            features = self.feature_model.get_intermediate_layers(
                images, self.select_layers, return_class_token=True)
        return features


# --------------------------------------------------------------------------
# deterministic parameter init (weights stacked per layer; matmul weights bf16)
# --------------------------------------------------------------------------
def init_params(key, *, in_chans, patch_size, embed_dim, depth, mlp_dim,
                num_tokens):
    keys = jax.random.split(key, 8)
    patch_dim = in_chans * patch_size * patch_size
    s = 0.02

    def nrm(k, shape, dtype=jnp.float32):
        return (jax.random.normal(k, shape, dtype=jnp.float32) * s).astype(dtype)

    bf16 = jnp.bfloat16
    params = {
        "w_pe": nrm(keys[0], (patch_dim, embed_dim), bf16),
        "b_pe": jnp.zeros((1, embed_dim), jnp.float32),
        "cls_token": nrm(keys[1], (1, 1, embed_dim)),
        "pos_embed": nrm(keys[2], (1, num_tokens, embed_dim)),
        "norm_g": jnp.ones((1, embed_dim), jnp.float32),
        "norm_b": jnp.zeros((1, embed_dim), jnp.float32),
        # stacked per-layer parameters: leading axis = depth
        "ln1_g": jnp.ones((depth, 1, embed_dim), jnp.float32),
        "ln1_b": jnp.zeros((depth, 1, embed_dim), jnp.float32),
        "wqkv": nrm(keys[3], (depth, embed_dim, 3 * embed_dim), bf16),
        "bqkv": jnp.zeros((depth, 1, 3 * embed_dim), jnp.float32),
        "wo": nrm(keys[4], (depth, embed_dim, embed_dim), bf16),
        "bo": jnp.zeros((depth, 1, embed_dim), jnp.float32),
        "ln2_g": jnp.ones((depth, 1, embed_dim), jnp.float32),
        "ln2_b": jnp.zeros((depth, 1, embed_dim), jnp.float32),
        "w1": nrm(keys[5], (depth, embed_dim, mlp_dim), bf16),
        "b1": jnp.zeros((depth, 1, mlp_dim), jnp.float32),
        "w2": nrm(keys[6], (depth, mlp_dim, embed_dim), bf16),
        "b2": jnp.zeros((depth, 1, embed_dim), jnp.float32),
    }
    return params


# --------------------------------------------------------------------------
if __name__ == "__main__":
    B, C, H, W = 2, 3, 16, 16
    patch_size = 4
    embed_dim = 256          # lane-dense: 2 x 128 lanes
    num_heads = 2            # head_dim = 128 = full lane/MXU width
    depth = 4
    mlp_dim = 4 * embed_dim
    num_patches = (H // patch_size) * (W // patch_size)      # 16
    num_tokens = num_patches + 1                             # 17 (cls + patches)
    select_layers = [1, 3]

    key = jax.random.PRNGKey(0)
    pkey, ikey = jax.random.split(key)
    params = init_params(pkey, in_chans=C, patch_size=patch_size,
                         embed_dim=embed_dim, depth=depth, mlp_dim=mlp_dim,
                         num_tokens=num_tokens)
    images = jax.random.normal(ikey, (B, C, H, W), dtype=jnp.float32)

    feature_model = ViTFeatureModel(params, patch_size=patch_size,
                                    num_heads=num_heads, depth=depth)
    model = ModelWithIntermediateLayers(feature_model, select_layers,
                                        contextlib.nullcontext)

    features = model(images)
    features = jax.block_until_ready(features)

    # sanity: one (patch_tokens, class_token) pair per selected layer
    assert len(features) == len(select_layers)
    for patch_tokens, class_token in features:
        assert patch_tokens.shape == (B, num_patches, embed_dim)
        assert class_token.shape == (B, embed_dim)
        assert bool(jnp.all(jnp.isfinite(patch_tokens)))
        assert bool(jnp.all(jnp.isfinite(class_token)))

    print("KERNEL_OK")
</pallas_src>

<mosaic_0001>
module attributes {stable_mosaic.version = 11 : i64} {
  func.func @_matmul_bias_kernel(%arg0: i32, %arg1: memref<32x48xf32, #tpu.memory_space<vmem>>, %arg2: memref<48x256xbf16, #tpu.memory_space<vmem>>, %arg3: memref<1x256xf32, #tpu.memory_space<vmem>>, %arg4: memref<32x256xf32, #tpu.memory_space<vmem>>) attributes {dimension_semantics = [#tpu.dimension_semantics<parallel>], iteration_bounds = array<i64: 1>, scalar_prefetch = 0 : i64, scratch_operands = 0 : i64, tpu.core_type = #tpu.core_type<tc>, window_params = [{transform_indices = @transform_0, window_bounds = array<i64: 32, 48>}, {pipeline_mode = #tpu.pipeline_mode<synchronous>, transform_indices = @transform_1, window_bounds = array<i64: 48, 256>}, {pipeline_mode = #tpu.pipeline_mode<synchronous>, transform_indices = @transform_2, window_bounds = array<i64: 1, 256>}, {transform_indices = @transform_3, window_bounds = array<i64: 32, 256>}]} {
    %c0 = arith.constant 0 : index
    %c0_0 = arith.constant 0 : index
    %0 = vector.load %arg1[%c0, %c0_0] : memref<32x48xf32, #tpu.memory_space<vmem>>, vector<32x48xf32>
    %1 = arith.truncf %0 : vector<32x48xf32> to vector<32x48xbf16>
    %c0_1 = arith.constant 0 : index
    %c0_2 = arith.constant 0 : index
    %2 = vector.load %arg2[%c0_1, %c0_2] : memref<48x256xbf16, #tpu.memory_space<vmem>>, vector<48x256xbf16>
    %cst = arith.constant dense<0.000000e+00> : vector<32x256xf32>
    %3 = tpu.matmul %1, %2, %cst {dimension_numbers = #tpu.dot_dimension_numbers<[1], [0], [0], [1], [0, 0, 1, 1], [], []>} : vector<32x48xbf16>, vector<48x256xbf16>, vector<32x256xf32> -> vector<32x256xf32>
    %c0_3 = arith.constant 0 : index
    %c0_4 = arith.constant 0 : index
    %4 = vector.load %arg3[%c0_3, %c0_4] : memref<1x256xf32, #tpu.memory_space<vmem>>, vector<1x256xf32>
    %5 = vector.broadcast %4 : vector<1x256xf32> to vector<32x256xf32>
    %6 = arith.addf %3, %5 : vector<32x256xf32>
    %c0_5 = arith.constant 0 : index
    %c0_6 = arith.constant 0 : index
    %7 = vector.load %arg4[%c0_5, %c0_6] : memref<32x256xf32, #tpu.memory_space<vmem>>, vector<32x256xf32>
    tpu.vector_store %arg4[%c0_5, %c0_6], %6 {strides = array<i32>} : memref<32x256xf32, #tpu.memory_space<vmem>>, vector<32x256xf32>,
    return
  }
  func.func @transform_0(%arg0: i32) -> (i32, i32) {
    %c0_i32 = arith.constant 0 : i32
    %c0_i32_0 = arith.constant 0 : i32
    return %arg0, %c0_i32 : i32, i32
  }
  func.func @transform_1(%arg0: i32) -> (i32, i32) {
    %c0_i32 = arith.constant 0 : i32
    %c0_i32_0 = arith.constant 0 : i32
    %c0_i32_1 = arith.constant 0 : i32
    return %c0_i32, %c0_i32_0 : i32, i32
  }
  func.func @transform_2(%arg0: i32) -> (i32, i32) {
    %c0_i32 = arith.constant 0 : i32
    %c0_i32_0 = arith.constant 0 : i32
    %c0_i32_1 = arith.constant 0 : i32
    return %c0_i32, %c0_i32_0 : i32, i32
  }
  func.func @transform_3(%arg0: i32) -> (i32, i32) {
    %c0_i32 = arith.constant 0 : i32
    %c0_i32_0 = arith.constant 0 : i32
    return %arg0, %c0_i32 : i32, i32
  }
}

</mosaic_0001>

<llo_original>
// kernel: tpu_custom_call.1
$region0: #{tpu_custom_call.1}
  #allocation0 [shape = 'u32[]', space=smem, size = 0x4, offset = 0x4, fixed_abs, tag = 'smem constant byte address 0x4 - core index']
  #allocation1 [shape = 'u32[72,128]{1,0:T(1,128)}', space=vmem, size = 0x9000, scoped, tag = 'internal scratch']
  %s0 = inlined_call_operand.hbm [shape: f32[32,48], index: 0, kind: input, shape index: {}]
  %s1 = inlined_call_operand.hbm [shape: bf16[48,256], index: 1, kind: input, shape index: {}]
  %s2 = inlined_call_operand.hbm [shape: f32[1,256], index: 2, kind: input, shape index: {}]
  %s3 = inlined_call_operand.hbm [shape: f32[32,256], index: 3, kind: output, shape index: {}]
  %s4 = sld [smem:[#allocation0]]
  $region34: #{tpu_custom_call.1} parent=0
    _
  %s6 = ssub.s32 1, %s4
  %s7 = scalar_select 0, %s6, %s4
  $region1: #{tpu_custom_call.1} parent=0
    #allocation2 [shape = 'u8[16384]{0}', space=vmem, size = 0x4000, scoped, tag = 'input window, operand 0, single buffered']
    #allocation3 [shape = 's32[1]{0}', space=sflag, size = 0x4, scoped, tag = 'scoped memory for tpu_custom_call.1']
    #allocation4 [shape = 's32[1]{0}', space=sflag, size = 0x4, scoped, tag = 'scoped memory for tpu_custom_call.1']
    #allocation5 [shape = 'u8[24576]{0}', space=vmem, size = 0x6000, scoped, tag = 'input window, operand 1, single buffered']
    #allocation6 [shape = 's32[1]{0}', space=sflag, size = 0x4, scoped, tag = 'scoped memory for tpu_custom_call.1']
    #allocation7 [shape = 'u8[1024]{0}', space=vmem, size = 0x400, scoped, tag = 'input window, operand 2, single buffered']
    #allocation8 [shape = 'u8[32768]{0}', space=vmem, size = 0x8000, scoped, tag = 'output window, operand 0, single buffered']
    %8 = vsyncpa [#allocation3], 0
    %9 = vsyncpa [#allocation6], 0
    %10 = vsyncpa [#allocation4], 0
    // Predicated region
    $region2: #{tpu_custom_call.1} parent=1 // pred_check
      _
    $region3: #{tpu_custom_call.1} parent=1 // pred_check_branch
      %12 = sbr.rel (0) target = $region5
    $region4: #{tpu_custom_call.1} parent=1 // pred_region
      %14 = vsyncadd [#allocation3], 0
      %s15 = sshll.u32 %s0, 4
      %s16 = int_to_ptr.hbm [resolvable:$true] %s15
      %s17 = sshll.u32 [#allocation2], 4
      %s18 = int_to_ptr.vmem [resolvable:$true] %s17
      %23 = dma.hbm_to_vmem [thread:$0]  %s16, 512, %s18, [#allocation3], 128, 128, 8
    $region5: #{tpu_custom_call.1} parent=1 // pred_fallthru
      _
    // Predicated region
    $region6: #{tpu_custom_call.1} parent=1 // pred_check
      _
    $region7: #{tpu_custom_call.1} parent=1 // pred_check_branch
      %25 = sbr.rel (0) target = $region9
    $region8: #{tpu_custom_call.1} parent=1 // pred_region
      %27 = vsyncadd [#allocation6], 0
      %s28 = sshll.u32 %s1, 4
      %s29 = int_to_ptr.hbm [resolvable:$true] %s28
      %s30 = sshll.u32 [#allocation5], 4
      %s31 = int_to_ptr.vmem [resolvable:$true] %s30
      %36 = dma.hbm_to_vmem [thread:$0]  %s29, 768, %s31, [#allocation6], 128, 128, 8
    $region9: #{tpu_custom_call.1} parent=1 // pred_fallthru
      _
    // Predicated region
    $region10: #{tpu_custom_call.1} parent=1 // pred_check
      _
    $region11: #{tpu_custom_call.1} parent=1 // pred_check_branch
      %38 = sbr.rel (0) target = $region13
    $region12: #{tpu_custom_call.1} parent=1 // pred_region
      %40 = vsyncadd [#allocation6], 0
      %s42 = sshll.u32 %s2, 4
      %s43 = int_to_ptr.hbm [resolvable:$true] %s42
      %s44 = sshll.u32 [#allocation7], 4
      %s45 = int_to_ptr.vmem [resolvable:$true] %s44
      %47 = dma.hbm_to_vmem [thread:$0]  %s43, 32, %s45, [#allocation6]
    $region13: #{tpu_custom_call.1} parent=1 // pred_fallthru
      _
    // Predicated region
    $region14: #{tpu_custom_call.1} parent=1 // pred_check
      _
    $region15: #{tpu_custom_call.1} parent=1 // pred_check_branch
      %49 = sbr.rel (0) target = $region17
    $region16: #{tpu_custom_call.1} parent=1 // pred_region
      %51 = dma.done [#allocation3], 512
    $region17: #{tpu_custom_call.1} parent=1 // pred_fallthru
      _
    // Predicated region
    $region18: #{tpu_custom_call.1} parent=1 // pred_check
      _
    $region19: #{tpu_custom_call.1} parent=1 // pred_check_branch
      %53 = sbr.rel (0) target = $region21
    $region20: #{tpu_custom_call.1} parent=1 // pred_region
      %55 = dma.done [#allocation6], 768
    $region21: #{tpu_custom_call.1} parent=1 // pred_fallthru
      _
    // Predicated region
    $region22: #{tpu_custom_call.1} parent=1 // pred_check
      _
    $region23: #{tpu_custom_call.1} parent=1 // pred_check_branch
      %57 = sbr.rel (0) target = $region25
    $region24: #{tpu_custom_call.1} parent=1 // pred_region
      %59 = dma.done [#allocation6], 32
    $region25: #{tpu_custom_call.1} parent=1 // pred_fallthru
      _
    %v61 = vld [vmem:[#allocation2] sm:$0xff]
    %v62 = vld [vmem:[#allocation2 + $0x8] sm:$0xff]
    %v63 = vld [vmem:[#allocation2 + $0x10] sm:$0xff]
    %v64 = vld [vmem:[#allocation2 + $0x18] sm:$0xff]
    %v65 = vpack.c.bf16 %v62, %v61
    %v66 = vpack.c.bf16 %v64, %v63
    %v67 = vld [vmem:[#allocation5] sm:$0xff]
    %v68 = vld [vmem:[#allocation5 + $0x8] sm:$0xff]
    %v69 = vld [vmem:[#allocation5 + $0x10] sm:$0xff]
    %v70 = vld [vmem:[#allocation5 + $0x18] sm:$0xff]
    %v71 = vld [vmem:[#allocation5 + $0x20] sm:$0xff]
    %v72 = vld [vmem:[#allocation5 + $0x28] sm:$0xff]
    %v73 = vld [vmem:[#allocation7] sm:$0x3]
    %v75 = vperm.slane %v73, 0
    %v76 = vperm.slane %v73, 1
    %v85 = vunpack.c.l.b16 %v67
    %v86 = vunpack.c.h.b16 %v67
    %v87 = vunpack.c.l.b16 %v68
    %v88 = vunpack.c.h.b16 %v68
    %v89 = vunpack.c.l.b16 %v69
    %v90 = vunpack.c.h.b16 %v69
    %v91 = vunpack.c.l.b16 %v70
    %v92 = vunpack.c.h.b16 %v70
    %v93 = vunpack.c.l.b16 %v71
    %v94 = vunpack.c.h.b16 %v71
    %v95 = vunpack.c.l.b16 %v72
    %v96 = vunpack.c.h.b16 %v72
    %v97 = vpack.c.b16 %v87, %v85
    %v98 = vpack.c.b16 %v88, %v86
    %v99 = vpack.c.b16 %v91, %v89
    %v100 = vpack.c.b16 %v92, %v90
    %v101 = vpack.c.b16 %v95, %v93
    %v102 = vpack.c.b16 %v96, %v94
    %vm109 = vcmask 392192
    %v111 = vsel %vm109, %v65, 0
    %v114 = vsel %vm109, %v66, 0
    %116 = vmatpush.bf16.msra.mxu0 0
    %117 = vmatpush.bf16.msra.mxu0 0
    %118 = vmatpush.bf16.msra.mxu0 0
    %119 = vmatpush.bf16.msra.mxu0 0
    %120 = vmatpush.bf16.msra.mxu0 0
    %121 = vmatpush.bf16.msra.mxu0 %v101
    %122 = vmatpush.bf16.msra.mxu0 %v99
    %123 = vmatpush.bf16.msra.mxu0 %v97
    %124 = vmatmul.bf16.gmra.mxu0 %v111
    %v125 = vpop.f32.mrf.mxu0
    %v126 = vadd.f32 %v75, %v125
    %v127 = vpop.f32.mrf.mxu0
    %v128 = vadd.f32 %v75, %v127
    %129 = vmatmul.bf16.gmra.mxu0 %v114
    %v130 = vpop.f32.mrf.mxu0
    %v131 = vadd.f32 %v75, %v130
    %v132 = vpop.f32.mrf.mxu0
    %v133 = vadd.f32 %v75, %v132
    %134 = vdwg.mxu0
    %135 = vmatpush.bf16.msra.mxu0 0
    %136 = vmatpush.bf16.msra.mxu0 0
    %137 = vmatpush.bf16.msra.mxu0 0
    %138 = vmatpush.bf16.msra.mxu0 0
    %139 = vmatpush.bf16.msra.mxu0 0
    %140 = vmatpush.bf16.msra.mxu0 %v102
    %141 = vmatpush.bf16.msra.mxu0 %v100
    %142 = vmatpush.bf16.msra.mxu0 %v98
    %143 = vmatmul.bf16.gmra.mxu0 %v111
    %v144 = vpop.f32.mrf.mxu0
    %v145 = vadd.f32 %v76, %v144
    %v146 = vpop.f32.mrf.mxu0
    %v147 = vadd.f32 %v76, %v146
    %148 = vmatmul.bf16.gmra.mxu0 %v114
    %v149 = vpop.f32.mrf.mxu0
    %v150 = vadd.f32 %v76, %v149
    %v151 = vpop.f32.mrf.mxu0
    %v152 = vadd.f32 %v76, %v151
    %153 = vdwg.mxu0
    %154 = vst [vmem:[#allocation8] sm:$0xff] %v126
    %155 = vst [vmem:[#allocation8 + $0x8] sm:$0xff] %v145
    %156 = vst [vmem:[#allocation8 + $0x10] sm:$0xff] %v128
    %157 = vst [vmem:[#allocation8 + $0x18] sm:$0xff] %v147
    %158 = vst [vmem:[#allocation8 + $0x20] sm:$0xff] %v131
    %159 = vst [vmem:[#allocation8 + $0x28] sm:$0xff] %v150
    %160 = vst [vmem:[#allocation8 + $0x30] sm:$0xff] %v133
    %161 = vst [vmem:[#allocation8 + $0x38] sm:$0xff] %v152
    // Predicated region
    $region26: #{tpu_custom_call.1} parent=1 // pred_check
      _
    $region27: #{tpu_custom_call.1} parent=1 // pred_check_branch
      %163 = sbr.rel (0) target = $region29
    $region28: #{tpu_custom_call.1} parent=1 // pred_region
      %165 = vsyncadd [#allocation4], 0
      %s166 = sshll.u32 [#allocation8], 4
      %s167 = int_to_ptr.vmem [resolvable:$true] %s166
      %s168 = sshll.u32 %s3, 4
      %s169 = int_to_ptr.hbm [resolvable:$true] %s168
      %174 = dma.vmem_to_hbm [thread:$0]  %s167, 1024, %s169, [#allocation4], 256, 256, 16
    $region29: #{tpu_custom_call.1} parent=1 // pred_fallthru
      _
    // Predicated region
    $region30: #{tpu_custom_call.1} parent=1 // pred_check
      _
    $region31: #{tpu_custom_call.1} parent=1 // pred_check_branch
      %176 = sbr.rel (0) target = $region33
    $region32: #{tpu_custom_call.1} parent=1 // pred_region
      %178 = dma.done [#allocation4], 1024
    $region33: #{tpu_custom_call.1} parent=1 // pred_fallthru
      _
    %179 = vsyncpa [#allocation3], 1
    %180 = vsyncpa [#allocation6], 1
    %181 = vsyncpa [#allocation4], 1

</llo_original>
